<compile_context>
chip_gen: v5e
topology: v5e:2x2
jax: 0.10.0
libtpu: 0.0.40
codegen_flags: <defaults>
</compile_context>

<pallas_src>
import functools

import jax
import jax.numpy as jnp
from jax.experimental import pallas as pl
from jax.experimental.pallas import tpu as pltpu


def _round_up(x, m):
    return (x + m - 1) // m * m


# ---------------------------------------------------------------------------
# Fused kernel: depthwise conv (BN folded) -> 1x1 conv (+ folded bias)
# ---------------------------------------------------------------------------
def _make_kernel(K, stride, TH, TH_IN, Wo, Cp_in, Cp_out):
    def kernel(x_hbm, wdw_ref, wpw_ref, b_ref, o_ref, xbuf):
        # x_hbm : (N, Hp, Wp, Cp_in) spatially padded input, left in HBM
        # wdw   : (K, K, Cp_in)   depthwise weights, BN scale pre-folded
        # wpw   : (Cp_in, Cp_out) 1x1 conv weights
        # b     : (1, Cp_out)     pw bias + (dw bias & BN shift) @ wpw
        # o_ref : (1, TH, Wo, Cp_out) output row tile
        # xbuf  : (TH_IN, Wp, Cp_in) VMEM scratch for the halo'd row window
        n = pl.program_id(0)
        r = pl.program_id(1)
        row0 = pl.multiple_of(r * (TH * stride), TH * stride)

        # Manual DMA: only the rows this tile needs, HBM -> VMEM.
        pltpu.sync_copy(x_hbm.at[n, pl.ds(row0, TH_IN)], xbuf)

        wdw = wdw_ref[...]                          # (K, K, Cp_in), tiny
        acc = jnp.zeros((TH, Wo, Cp_in), jnp.float32)
        for dy in range(K):                         # static, fully unrolled taps
            for dx in range(K):
                if stride == 1:
                    win = xbuf[dy:dy + TH, dx:dx + Wo, :]
                else:
                    win = xbuf[pl.ds(dy, TH, stride), pl.ds(dx, Wo, stride), :]
                acc = acc + win * wdw[dy, dx, :]

        # 1x1 conv as a lane-dense channel matmul on the MXU (+ fused bias).
        h = acc.reshape(TH * Wo, Cp_in)
        z = jnp.dot(h, wpw_ref[...], preferred_element_type=jnp.float32)
        z = z + b_ref[...]
        o_ref[...] = z.reshape(1, TH, Wo, Cp_out).astype(o_ref.dtype)

    return kernel


# ---------------------------------------------------------------------------
# Wrapper: NCHW in / NCHW out, channel padding, row tiling, pallas_call
# ---------------------------------------------------------------------------
def depthwise_conv2d(x_nchw, params, *, kernel_size, padding, stride=1,
                     row_tile=None):
    N, Cin, H, W = x_nchw.shape
    K, p, s = kernel_size, padding, stride
    w_dw, w_pw, bias = params["w_dw"], params["w_pw"], params["bias"]
    Cout = w_pw.shape[1]

    Ho = (H + 2 * p - K) // s + 1
    Wo = (W + 2 * p - K) // s + 1

    Cp_in = _round_up(Cin, 128)
    Cp_out = _round_up(Cout, 128)

    # Row-tile selection (must divide Ho).
    if row_tile is None:
        row_tile = max(1, min(Ho, 512 // max(Wo, 1)))
    TH = min(row_tile, Ho)
    while Ho % TH:
        TH -= 1
    TH_IN = (TH - 1) * s + K

    # NCHW -> NHWC, pad channels to the 128-lane width, pad spatially (halo).
    x = jnp.transpose(x_nchw, (0, 2, 3, 1))
    x = jnp.pad(x, ((0, 0), (0, 0), (0, 0), (0, Cp_in - Cin)))
    x = jnp.pad(x, ((0, 0), (p, p), (p, p), (0, 0)))
    Wp = W + 2 * p

    wdw_p = jnp.pad(w_dw, ((0, 0), (0, 0), (0, Cp_in - Cin)))
    wpw_p = jnp.pad(w_pw, ((0, Cp_in - Cin), (0, Cp_out - Cout)))
    b_p = jnp.pad(bias, (0, Cp_out - Cout)).reshape(1, Cp_out)

    kernel = _make_kernel(K, s, TH, TH_IN, Wo, Cp_in, Cp_out)

    # VMEM budget: halo'd input window + double-buffered output tile + weights.
    est = 4 * (TH_IN * Wp * Cp_in + 2 * TH * Wo * Cp_out
               + 2 * (K * K * Cp_in + Cp_in * Cp_out + Cp_out))
    vmem_limit = int(min(96 * 2**20, max(32 * 2**20, 3 * est)))

    out = pl.pallas_call(
        kernel,
        out_shape=jax.ShapeDtypeStruct((N, Ho, Wo, Cp_out), jnp.float32),
        grid_spec=pltpu.PrefetchScalarGridSpec(
            num_scalar_prefetch=0,
            grid=(N, Ho // TH),
            in_specs=[
                pl.BlockSpec(memory_space=pl.ANY),            # manual DMA input
                pl.BlockSpec((K, K, Cp_in), lambda n, r: (0, 0, 0)),
                pl.BlockSpec((Cp_in, Cp_out), lambda n, r: (0, 0)),
                pl.BlockSpec((1, Cp_out), lambda n, r: (0, 0)),
            ],
            out_specs=pl.BlockSpec((1, TH, Wo, Cp_out),
                                   lambda n, r: (n, r, 0, 0)),
            scratch_shapes=[pltpu.VMEM((TH_IN, Wp, Cp_in), jnp.float32)],
        ),
        compiler_params=pltpu.CompilerParams(
            dimension_semantics=("parallel", "parallel"),
            vmem_limit_bytes=vmem_limit,
        ),
    )(x, wdw_p, wpw_p, b_p)

    out = out[..., :Cout]                        # drop channel padding
    return jnp.transpose(out, (0, 3, 1, 2))      # NHWC -> NCHW


# ---------------------------------------------------------------------------
# Host-side parameter folding (torch layout -> fused kernel layout)
# ---------------------------------------------------------------------------
def fold_params(tp):
    """dw conv bias + BatchNorm (running stats) folded into weights/bias."""
    scale = tp["bn_gamma"] / jnp.sqrt(tp["bn_var"] + tp["bn_eps"])     # (Cin,)
    shift = tp["bn_beta"] + (tp["dw_bias"] - tp["bn_mean"]) * scale    # (Cin,)
    w_dw = jnp.transpose(tp["dw_weight"][:, 0], (1, 2, 0)) * scale     # (K,K,Cin)
    w_pw = jnp.transpose(tp["pw_weight"][:, :, 0, 0], (1, 0))          # (Cin,Cout)
    bias = tp["pw_bias"] + shift @ w_pw                                # (Cout,)
    return dict(w_dw=w_dw, w_pw=w_pw, bias=bias)


# ---------------------------------------------------------------------------
# Pure-JAX reference (matches the PyTorch module in eval mode)
# ---------------------------------------------------------------------------
def reference(x, tp, kernel_size, padding, stride):
    y = jax.lax.conv_general_dilated(
        x, tp["dw_weight"], window_strides=(stride, stride),
        padding=[(padding, padding), (padding, padding)],
        dimension_numbers=("NCHW", "OIHW", "NCHW"),
        feature_group_count=x.shape[1])
    y = y + tp["dw_bias"][None, :, None, None]
    inv = tp["bn_gamma"] / jnp.sqrt(tp["bn_var"] + tp["bn_eps"])
    y = (y - tp["bn_mean"][None, :, None, None]) * inv[None, :, None, None] \
        + tp["bn_beta"][None, :, None, None]
    z = jax.lax.conv_general_dilated(
        y, tp["pw_weight"], window_strides=(1, 1), padding="VALID",
        dimension_numbers=("NCHW", "OIHW", "NCHW"))
    return z + tp["pw_bias"][None, :, None, None]


if __name__ == "__main__":
    dim_in, dim_out = 4, 8
    kernel_size, padding, stride = 3, 1, 1
    N, H, W = 2, 16, 16

    key = jax.random.PRNGKey(0)
    ks = jax.random.split(key, 9)

    def nrm(k, shape, s=0.1):
        return s * jax.random.normal(k, shape, jnp.float32)

    x = jax.random.normal(ks[0], (N, dim_in, H, W), jnp.float32)
    torch_params = dict(
        dw_weight=nrm(ks[1], (dim_in, 1, kernel_size, kernel_size)),
        dw_bias=nrm(ks[2], (dim_in,)),
        bn_gamma=jax.random.uniform(ks[3], (dim_in,), minval=0.5, maxval=1.5),
        bn_beta=nrm(ks[4], (dim_in,)),
        bn_mean=nrm(ks[5], (dim_in,)),
        bn_var=jax.random.uniform(ks[6], (dim_in,), minval=0.5, maxval=1.5),
        bn_eps=1e-5,
        pw_weight=nrm(ks[7], (dim_out, dim_in, 1, 1)),
        pw_bias=nrm(ks[8], (dim_out,)),
    )
    params = fold_params(torch_params)

    fwd = jax.jit(functools.partial(
        depthwise_conv2d, kernel_size=kernel_size, padding=padding,
        stride=stride, row_tile=8))
    out = fwd(x, params)
    jax.block_until_ready(out)

    ref = reference(x, torch_params, kernel_size, padding, stride)
    assert out.shape == (N, dim_out, H, W) and out.dtype == jnp.float32
    assert jnp.allclose(out, ref, atol=1e-3, rtol=1e-3), \
        float(jnp.max(jnp.abs(out - ref)))
    print("KERNEL_OK")
</pallas_src>

<mosaic_0001>
module attributes {stable_mosaic.version = 11 : i64} {
  func.func @kernel(%arg0: i32, %arg1: i32, %arg2: memref<2x18x18x128xf32, #tpu.memory_space<any>>, %arg3: memref<3x3x128xf32, #tpu.memory_space<vmem>>, %arg4: memref<128x128xf32, #tpu.memory_space<vmem>>, %arg5: memref<1x128xf32, #tpu.memory_space<vmem>>, %arg6: memref<1x8x16x128xf32, #tpu.memory_space<vmem>>, %arg7: memref<10x18x128xf32, #tpu.memory_space<vmem>>) attributes {dimension_semantics = [#tpu.dimension_semantics<parallel>, #tpu.dimension_semantics<parallel>], iteration_bounds = array<i64: 2, 2>, scalar_prefetch = 0 : i64, scratch_operands = 1 : i64, tpu.core_type = #tpu.core_type<tc>, window_params = [{}, {pipeline_mode = #tpu.pipeline_mode<synchronous>, transform_indices = @transform_1, window_bounds = array<i64: 3, 3, 128>}, {pipeline_mode = #tpu.pipeline_mode<synchronous>, transform_indices = @transform_2, window_bounds = array<i64: 128, 128>}, {pipeline_mode = #tpu.pipeline_mode<synchronous>, transform_indices = @transform_3, window_bounds = array<i64: 1, 128>}, {transform_indices = @transform_4, window_bounds = array<i64: 1, 8, 16, 128>}]} {
    %c8_i32 = arith.constant 8 : i32
    %0 = arith.muli %arg1, %c8_i32 : i32
    %1 = tpu.assume_multiple %0, 8 : i32
    "tpu.region"() ({
      %75 = tpu.sem_alloc : memref<!tpu.dma_semaphore, #tpu.memory_space<semaphore_mem>>
      %c0_i32 = arith.constant 0 : i32
      %c0_i32_36 = arith.constant 0 : i32
      %76 = tpu.memref_slice %arg2[%arg0, %1, %c0_i32, %c0_i32_36] : memref<2x18x18x128xf32, #tpu.memory_space<any>> -> memref<1x10x18x128xf32, #tpu.memory_space<any>>
      %77 = tpu.memref_squeeze %76 : memref<1x10x18x128xf32, #tpu.memory_space<any>> -> memref<10x18x128xf32, #tpu.memory_space<any>>
      tpu.enqueue_dma source(%77 : memref<10x18x128xf32, #tpu.memory_space<any>>) target(%arg7 : memref<10x18x128xf32, #tpu.memory_space<vmem>>) target_semaphore(%75 : memref<!tpu.dma_semaphore, #tpu.memory_space<semaphore_mem>>)
      %c0_i32_37 = arith.constant 0 : i32
      %c0_i32_38 = arith.constant 0 : i32
      %78 = tpu.memref_slice %arg2[%arg0, %1, %c0_i32_37, %c0_i32_38] : memref<2x18x18x128xf32, #tpu.memory_space<any>> -> memref<1x10x18x128xf32, #tpu.memory_space<any>>
      %79 = tpu.memref_squeeze %78 : memref<1x10x18x128xf32, #tpu.memory_space<any>> -> memref<10x18x128xf32, #tpu.memory_space<any>>
      tpu.wait_dma2 semaphore(%75 : memref<!tpu.dma_semaphore, #tpu.memory_space<semaphore_mem>>) src(%79 : memref<10x18x128xf32, #tpu.memory_space<any>>) dst(%arg7 : memref<10x18x128xf32, #tpu.memory_space<vmem>>)
      tpu.yield
    }) : () -> ()
    %c0 = arith.constant 0 : index
    %c0_0 = arith.constant 0 : index
    %c0_1 = arith.constant 0 : index
    %2 = vector.load %arg3[%c0, %c0_0, %c0_1] : memref<3x3x128xf32, #tpu.memory_space<vmem>>, vector<3x3x128xf32>
    %cst = arith.constant 0.000000e+00 : f32
    %3 = vector.broadcast %cst : f32 to vector<8x16x128xf32>
    %c0_2 = arith.constant 0 : index
    %c0_3 = arith.constant 0 : index
    %c0_4 = arith.constant 0 : index
    %4 = vector.load %arg7[%c0_2, %c0_3, %c0_4] : memref<10x18x128xf32, #tpu.memory_space<vmem>>, vector<8x16x128xf32>
    %5 = vector.extract_strided_slice %2 {offsets = [0, 0, 0], sizes = [1, 1, 128], strides = [1, 1, 1]} : vector<3x3x128xf32> to vector<1x1x128xf32>
    %6 = vector.shape_cast %5 : vector<1x1x128xf32> to vector<128xf32>
    %7 = vector.shape_cast %6 : vector<128xf32> to vector<1x1x128xf32>
    %8 = vector.broadcast %7 : vector<1x1x128xf32> to vector<8x16x128xf32>
    %9 = arith.mulf %4, %8 : vector<8x16x128xf32>
    %10 = arith.addf %3, %9 : vector<8x16x128xf32>
    %c0_5 = arith.constant 0 : index
    %c1 = arith.constant 1 : index
    %c0_6 = arith.constant 0 : index
    %11 = vector.load %arg7[%c0_5, %c1, %c0_6] : memref<10x18x128xf32, #tpu.memory_space<vmem>>, vector<8x16x128xf32>
    %12 = vector.extract_strided_slice %2 {offsets = [0, 1, 0], sizes = [1, 1, 128], strides = [1, 1, 1]} : vector<3x3x128xf32> to vector<1x1x128xf32>
    %13 = vector.shape_cast %12 : vector<1x1x128xf32> to vector<128xf32>
    %14 = vector.shape_cast %13 : vector<128xf32> to vector<1x1x128xf32>
    %15 = vector.broadcast %14 : vector<1x1x128xf32> to vector<8x16x128xf32>
    %16 = arith.mulf %11, %15 : vector<8x16x128xf32>
    %17 = arith.addf %10, %16 : vector<8x16x128xf32>
    %c0_7 = arith.constant 0 : index
    %c2 = arith.constant 2 : index
    %c0_8 = arith.constant 0 : index
    %18 = vector.load %arg7[%c0_7, %c2, %c0_8] : memref<10x18x128xf32, #tpu.memory_space<vmem>>, vector<8x16x128xf32>
    %19 = vector.extract_strided_slice %2 {offsets = [0, 2, 0], sizes = [1, 1, 128], strides = [1, 1, 1]} : vector<3x3x128xf32> to vector<1x1x128xf32>
    %20 = vector.shape_cast %19 : vector<1x1x128xf32> to vector<128xf32>
    %21 = vector.shape_cast %20 : vector<128xf32> to vector<1x1x128xf32>
    %22 = vector.broadcast %21 : vector<1x1x128xf32> to vector<8x16x128xf32>
    %23 = arith.mulf %18, %22 : vector<8x16x128xf32>
    %24 = arith.addf %17, %23 : vector<8x16x128xf32>
    %c1_9 = arith.constant 1 : index
    %c0_10 = arith.constant 0 : index
    %c0_11 = arith.constant 0 : index
    %25 = vector.load %arg7[%c1_9, %c0_10, %c0_11] : memref<10x18x128xf32, #tpu.memory_space<vmem>>, vector<8x16x128xf32>
    %26 = vector.extract_strided_slice %2 {offsets = [1, 0, 0], sizes = [1, 1, 128], strides = [1, 1, 1]} : vector<3x3x128xf32> to vector<1x1x128xf32>
    %27 = vector.shape_cast %26 : vector<1x1x128xf32> to vector<128xf32>
    %28 = vector.shape_cast %27 : vector<128xf32> to vector<1x1x128xf32>
    %29 = vector.broadcast %28 : vector<1x1x128xf32> to vector<8x16x128xf32>
    %30 = arith.mulf %25, %29 : vector<8x16x128xf32>
    %31 = arith.addf %24, %30 : vector<8x16x128xf32>
    %c1_12 = arith.constant 1 : index
    %c1_13 = arith.constant 1 : index
    %c0_14 = arith.constant 0 : index
    %32 = vector.load %arg7[%c1_12, %c1_13, %c0_14] : memref<10x18x128xf32, #tpu.memory_space<vmem>>, vector<8x16x128xf32>
    %33 = vector.extract_strided_slice %2 {offsets = [1, 1, 0], sizes = [1, 1, 128], strides = [1, 1, 1]} : vector<3x3x128xf32> to vector<1x1x128xf32>
    %34 = vector.shape_cast %33 : vector<1x1x128xf32> to vector<128xf32>
    %35 = vector.shape_cast %34 : vector<128xf32> to vector<1x1x128xf32>
    %36 = vector.broadcast %35 : vector<1x1x128xf32> to vector<8x16x128xf32>
    %37 = arith.mulf %32, %36 : vector<8x16x128xf32>
    %38 = arith.addf %31, %37 : vector<8x16x128xf32>
    %c1_15 = arith.constant 1 : index
    %c2_16 = arith.constant 2 : index
    %c0_17 = arith.constant 0 : index
    %39 = vector.load %arg7[%c1_15, %c2_16, %c0_17] : memref<10x18x128xf32, #tpu.memory_space<vmem>>, vector<8x16x128xf32>
    %40 = vector.extract_strided_slice %2 {offsets = [1, 2, 0], sizes = [1, 1, 128], strides = [1, 1, 1]} : vector<3x3x128xf32> to vector<1x1x128xf32>
    %41 = vector.shape_cast %40 : vector<1x1x128xf32> to vector<128xf32>
    %42 = vector.shape_cast %41 : vector<128xf32> to vector<1x1x128xf32>
    %43 = vector.broadcast %42 : vector<1x1x128xf32> to vector<8x16x128xf32>
    %44 = arith.mulf %39, %43 : vector<8x16x128xf32>
    %45 = arith.addf %38, %44 : vector<8x16x128xf32>
    %c2_18 = arith.constant 2 : index
    %c0_19 = arith.constant 0 : index
    %c0_20 = arith.constant 0 : index
    %46 = vector.load %arg7[%c2_18, %c0_19, %c0_20] : memref<10x18x128xf32, #tpu.memory_space<vmem>>, vector<8x16x128xf32>
    %47 = vector.extract_strided_slice %2 {offsets = [2, 0, 0], sizes = [1, 1, 128], strides = [1, 1, 1]} : vector<3x3x128xf32> to vector<1x1x128xf32>
    %48 = vector.shape_cast %47 : vector<1x1x128xf32> to vector<128xf32>
    %49 = vector.shape_cast %48 : vector<128xf32> to vector<1x1x128xf32>
    %50 = vector.broadcast %49 : vector<1x1x128xf32> to vector<8x16x128xf32>
    %51 = arith.mulf %46, %50 : vector<8x16x128xf32>
    %52 = arith.addf %45, %51 : vector<8x16x128xf32>
    %c2_21 = arith.constant 2 : index
    %c1_22 = arith.constant 1 : index
    %c0_23 = arith.constant 0 : index
    %53 = vector.load %arg7[%c2_21, %c1_22, %c0_23] : memref<10x18x128xf32, #tpu.memory_space<vmem>>, vector<8x16x128xf32>
    %54 = vector.extract_strided_slice %2 {offsets = [2, 1, 0], sizes = [1, 1, 128], strides = [1, 1, 1]} : vector<3x3x128xf32> to vector<1x1x128xf32>
    %55 = vector.shape_cast %54 : vector<1x1x128xf32> to vector<128xf32>
    %56 = vector.shape_cast %55 : vector<128xf32> to vector<1x1x128xf32>
    %57 = vector.broadcast %56 : vector<1x1x128xf32> to vector<8x16x128xf32>
    %58 = arith.mulf %53, %57 : vector<8x16x128xf32>
    %59 = arith.addf %52, %58 : vector<8x16x128xf32>
    %c2_24 = arith.constant 2 : index
    %c2_25 = arith.constant 2 : index
    %c0_26 = arith.constant 0 : index
    %60 = vector.load %arg7[%c2_24, %c2_25, %c0_26] : memref<10x18x128xf32, #tpu.memory_space<vmem>>, vector<8x16x128xf32>
    %61 = vector.extract_strided_slice %2 {offsets = [2, 2, 0], sizes = [1, 1, 128], strides = [1, 1, 1]} : vector<3x3x128xf32> to vector<1x1x128xf32>
    %62 = vector.shape_cast %61 : vector<1x1x128xf32> to vector<128xf32>
    %63 = vector.shape_cast %62 : vector<128xf32> to vector<1x1x128xf32>
    %64 = vector.broadcast %63 : vector<1x1x128xf32> to vector<8x16x128xf32>
    %65 = arith.mulf %60, %64 : vector<8x16x128xf32>
    %66 = arith.addf %59, %65 : vector<8x16x128xf32>
    %67 = vector.shape_cast %66 : vector<8x16x128xf32> to vector<128x128xf32>
    %c0_27 = arith.constant 0 : index
    %c0_28 = arith.constant 0 : index
    %68 = vector.load %arg4[%c0_27, %c0_28] : memref<128x128xf32, #tpu.memory_space<vmem>>, vector<128x128xf32>
    %cst_29 = arith.constant dense<0.000000e+00> : vector<128x128xf32>
    %69 = tpu.matmul %67, %68, %cst_29 {dimension_numbers = #tpu.dot_dimension_numbers<[1], [0], [0], [1], [0, 0, 1, 1], [], []>} : vector<128x128xf32>, vector<128x128xf32>, vector<128x128xf32> -> vector<128x128xf32>
    %c0_30 = arith.constant 0 : index
    %c0_31 = arith.constant 0 : index
    %70 = vector.load %arg5[%c0_30, %c0_31] : memref<1x128xf32, #tpu.memory_space<vmem>>, vector<1x128xf32>
    %71 = vector.broadcast %70 : vector<1x128xf32> to vector<128x128xf32>
    %72 = arith.addf %69, %71 : vector<128x128xf32>
    %73 = vector.shape_cast %72 : vector<128x128xf32> to vector<1x8x16x128xf32>
    %c0_32 = arith.constant 0 : index
    %c0_33 = arith.constant 0 : index
    %c0_34 = arith.constant 0 : index
    %c0_35 = arith.constant 0 : index
    %74 = vector.load %arg6[%c0_32, %c0_33, %c0_34, %c0_35] : memref<1x8x16x128xf32, #tpu.memory_space<vmem>>, vector<1x8x16x128xf32>
    tpu.vector_store %arg6[%c0_32, %c0_33, %c0_34, %c0_35], %73 {strides = array<i32>} : memref<1x8x16x128xf32, #tpu.memory_space<vmem>>, vector<1x8x16x128xf32>,
    return
  }
  func.func @transform_1(%arg0: i32, %arg1: i32) -> (i32, i32, i32) {
    %c0_i32 = arith.constant 0 : i32
    %c0_i32_0 = arith.constant 0 : i32
    %c0_i32_1 = arith.constant 0 : i32
    %c0_i32_2 = arith.constant 0 : i32
    return %c0_i32, %c0_i32_0, %c0_i32_1 : i32, i32, i32
  }
  func.func @transform_2(%arg0: i32, %arg1: i32) -> (i32, i32) {
    %c0_i32 = arith.constant 0 : i32
    %c0_i32_0 = arith.constant 0 : i32
    %c0_i32_1 = arith.constant 0 : i32
    return %c0_i32, %c0_i32_0 : i32, i32
  }
  func.func @transform_3(%arg0: i32, %arg1: i32) -> (i32, i32) {
    %c0_i32 = arith.constant 0 : i32
    %c0_i32_0 = arith.constant 0 : i32
    %c0_i32_1 = arith.constant 0 : i32
    return %c0_i32, %c0_i32_0 : i32, i32
  }
  func.func @transform_4(%arg0: i32, %arg1: i32) -> (i32, i32, i32, i32) {
    %c0_i32 = arith.constant 0 : i32
    %c0_i32_0 = arith.constant 0 : i32
    %c0_i32_1 = arith.constant 0 : i32
    return %arg0, %arg1, %c0_i32, %c0_i32_0 : i32, i32, i32, i32
  }
}

</mosaic_0001>

<llo_original>
// kernel: depthwise_conv2d.1
$region0: #{depthwise_conv2d.1}
  #allocation0 [shape = 'u32[]', space=smem, size = 0x4, offset = 0x4, fixed_abs, tag = 'smem constant byte address 0x4 - core index']
  #allocation1 [shape = 'u32[72,128]{1,0:T(1,128)}', space=vmem, size = 0x9000, scoped, tag = 'internal scratch']
  #allocation2 [shape = 'f32[10,18,128]{2,1,0:T(8,128)}', space=vmem, size = 0x1e000, scoped, tag = 'scratch operand']
  #allocation4 [shape = 's32[]', space=sflag, size = 0x4, offset = 0, fixed_abs, tag = 'sflag constant byte address 0x0 - dummy sync flag']
  %s0 = inlined_call_operand.vmem [shape: f32[2,18,18,128], index: 0, kind: input, shape index: {}]
  %s1 = inlined_call_operand.vmem [shape: f32[3,3,128], index: 1, kind: input, shape index: {}]
  %s2 = inlined_call_operand.vmem [shape: f32[128,128], index: 2, kind: input, shape index: {}]
  %s3 = inlined_call_operand.vmem [shape: f32[1,128], index: 3, kind: input, shape index: {}]
  %s4 = inlined_call_operand.vmem [shape: f32[2,16,16,128], index: 4, kind: output, shape index: {}]
  %s5 = sld [smem:[#allocation0]]
  $region68: #{depthwise_conv2d.1} parent=0
    _
  %s7 = ssub.s32 1, %s5
  %s8 = scalar_select 0, %s7, %s5
  loop: start=0, step=1, limit=6
  $region2: #{depthwise_conv2d.1} parent=0 // loop_pre_header
    _
  $region3: #{depthwise_conv2d.1} parent=0 // loop_header
    %s10 = sphi 0, %s14
    %p11 = scmp.ge.s32.totalorder %s10, 6
    %s17 = sphi 0, %s29
    %s18 = sphi 0, %s25
    %s19 = sphi 0, %s17
    %s20 = sphi 0, %s18
    %s21 = sphi 0, %s19
    %s22 = sphi 0, %s20
    %s30 = sphi 0, %s30
    %s32 = sphi 0, %s30
    %s33 = sphi 0, %s32
    %s47 = sphi 0, %s33
    %s51 = sphi 0, %s51
    %s53 = sphi 0, %s51
    %s54 = sphi 0, %s53
    %s68 = sphi 0, %s54
    %s72 = sphi 0, %s72
    %s74 = sphi 0, %s72
    %s75 = sphi 0, %s74
    %s89 = sphi 0, %s75
    %s97 = sphi 0, %s99
    %s100 = sphi 0, %s97
    %s101 = sphi 0, %s100
    %s117 = sphi 0, %s101
  $region4: #{depthwise_conv2d.1} parent=0 // loop_header_branch
    %13 = sbr.rel (%p11) target = $region8
  $region5: #{depthwise_conv2d.1} parent=0 // loop_body
    %s15 = ssub.s32 %s10, 1
    %s16 = ssub.s32 %s10, 2
    %s23 = sadd.s32 1, %s18
    %p24 = scmp.ge.s32.totalorder %s23, 2
    %s25 = scalar_select %p24, 0, %s23
    %s26 = sadd.s32 1, %s17
    %s27 = scalar_select %p24, %s26, %s17
    %p28 = scmp.ge.s32.totalorder %s27, 2
    %s29 = scalar_select %p28, 0, %s27
    %s31 = sadd.s32 %s30, 1
    %p34 = scmp.eq.s32.totalorder %s10, 3
    %p35 = scmp.ne.s32.totalorder %s30, %s32
    %p36 = scmp.eq.s32.totalorder %s10, 0
    %p37 = por %p35, %p36
    %p38 = scmp.ne.s32.totalorder %s30, %s32
    %p39 = scmp.eq.s32.totalorder %s15, 3
    %p40 = por %p38, %p39
    %p41 = scmp.ne.s32.totalorder %s32, %s33
    %p42 = scmp.eq.s32.totalorder %s15, 0
    %p43 = por %p41, %p42
    %p44 = scmp.ne.s32.totalorder %s32, %s33
    %p45 = scmp.eq.s32.totalorder %s16, 3
    %p46 = por %p44, %p45
    %p48 = scmp.ne.s32.totalorder %s33, %s47
    %p49 = scmp.eq.s32.totalorder %s16, 0
    %p50 = por %p48, %p49
    %s52 = sadd.s32 %s51, 1
    %p55 = scmp.eq.s32.totalorder %s10, 3
    %p56 = scmp.ne.s32.totalorder %s51, %s53
    %p57 = scmp.eq.s32.totalorder %s10, 0
    %p58 = por %p56, %p57
    %p59 = scmp.ne.s32.totalorder %s51, %s53
    %p60 = scmp.eq.s32.totalorder %s15, 3
    %p61 = por %p59, %p60
    %p62 = scmp.ne.s32.totalorder %s53, %s54
    %p63 = scmp.eq.s32.totalorder %s15, 0
    %p64 = por %p62, %p63
    %p65 = scmp.ne.s32.totalorder %s53, %s54
    %p66 = scmp.eq.s32.totalorder %s16, 3
    %p67 = por %p65, %p66
    %p69 = scmp.ne.s32.totalorder %s54, %s68
    %p70 = scmp.eq.s32.totalorder %s16, 0
    %p71 = por %p69, %p70
    %s73 = sadd.s32 %s72, 1
    %p76 = scmp.eq.s32.totalorder %s10, 3
    %p77 = scmp.ne.s32.totalorder %s72, %s74
    %p78 = scmp.eq.s32.totalorder %s10, 0
    %p79 = por %p77, %p78
    %p80 = scmp.ne.s32.totalorder %s72, %s74
    %p81 = scmp.eq.s32.totalorder %s15, 3
    %p82 = por %p80, %p81
    %p83 = scmp.ne.s32.totalorder %s74, %s75
    %p84 = scmp.eq.s32.totalorder %s15, 0
    %p85 = por %p83, %p84
    %p86 = scmp.ne.s32.totalorder %s74, %s75
    %p87 = scmp.eq.s32.totalorder %s16, 3
    %p88 = por %p86, %p87
    %p90 = scmp.ne.s32.totalorder %s75, %s89
    %p91 = scmp.eq.s32.totalorder %s16, 0
    %p92 = por %p90, %p91
    %s93 = ssub.s32 %s17, %s29
    %s94 = ssub.s32 %s18, %s25
    %s95 = sor.u32 %s93, %s94
    %p96 = scmp.eq.s32.totalorder %s95, 0
    %s98 = sadd.s32 %s97, 1
    %s99 = scalar_select %p96, %s97, %s98
    %p102 = pneg %p96
    %p103 = scmp.eq.s32.totalorder %s10, 3
    %p104 = por %p102, %p103
    %p105 = scmp.ne.s32.totalorder %s97, %s100
    %p106 = scmp.eq.s32.totalorder %s10, 0
    %p107 = por %p105, %p106
    %p108 = scmp.ne.s32.totalorder %s97, %s100
    %p109 = scmp.eq.s32.totalorder %s15, 3
    %p110 = por %p108, %p109
    %p111 = scmp.ne.s32.totalorder %s100, %s101
    %p112 = scmp.eq.s32.totalorder %s15, 0
    %p113 = por %p111, %p112
    %p114 = scmp.ne.s32.totalorder %s100, %s101
    %p115 = scmp.eq.s32.totalorder %s16, 3
    %p116 = por %p114, %p115
    %p118 = scmp.ne.s32.totalorder %s101, %s117
    %p119 = scmp.eq.s32.totalorder %s16, 0
    %p120 = por %p118, %p119
    %p121 = scmp.le.s32.totalorder 1, %s10
    %p122 = scmp.lt.s32.totalorder %s10, 5
    %p123 = pnand %p121, %p122
    %p124 = pneg %p123
    // Predicated region
    $region9: #{depthwise_conv2d.1} parent=5 // pred_check
      _
    $region10: #{depthwise_conv2d.1} parent=5 // pred_check_branch
      %126 = sbr.rel (%p123) target = $region12
    $region11: #{depthwise_conv2d.1} parent=5 // pred_region
      %s127 = ssub.s32 %s10, 1
      // Predicated region
      $region13: #{depthwise_conv2d.1} parent=11 // pred_check
        %p128 = pneg %p43
      $region14: #{depthwise_conv2d.1} parent=11 // pred_check_branch
        %130 = sbr.rel (%p128) target = $region16
      $region15: #{depthwise_conv2d.1} parent=11 // pred_region
        _
      $region16: #{depthwise_conv2d.1} parent=11 // pred_fallthru
        _
      // Predicated region
      $region17: #{depthwise_conv2d.1} parent=11 // pred_check
        %p131 = pneg %p64
      $region18: #{depthwise_conv2d.1} parent=11 // pred_check_branch
        %133 = sbr.rel (%p131) target = $region20
      $region19: #{depthwise_conv2d.1} parent=11 // pred_region
        _
      $region20: #{depthwise_conv2d.1} parent=11 // pred_fallthru
        _
      // Predicated region
      $region21: #{depthwise_conv2d.1} parent=11 // pred_check
        %p134 = pneg %p85
      $region22: #{depthwise_conv2d.1} parent=11 // pred_check_branch
        %136 = sbr.rel (%p134) target = $region24
      $region23: #{depthwise_conv2d.1} parent=11 // pred_region
        _
      $region24: #{depthwise_conv2d.1} parent=11 // pred_fallthru
        _
    $region12: #{depthwise_conv2d.1} parent=5 // pred_fallthru
      _
    %p137 = scmp.lt.s32.totalorder %s10, 4
    // Predicated region
    $region25: #{depthwise_conv2d.1} parent=5 // pred_check
      %p138 = pneg %p137
    $region26: #{depthwise_conv2d.1} parent=5 // pred_check_branch
      %140 = sbr.rel (%p138) target = $region28
    $region27: #{depthwise_conv2d.1} parent=5 // pred_region
      _
    $region28: #{depthwise_conv2d.1} parent=5 // pred_fallthru
      _
    %p141 = scmp.le.s32.totalorder 1, %s10
    %p142 = scmp.lt.s32.totalorder %s10, 5
    %p143 = pnand %p141, %p142
    %p144 = pneg %p143
    // Predicated region
    $region29: #{depthwise_conv2d.1} parent=5 // pred_check
      _
    $region30: #{depthwise_conv2d.1} parent=5 // pred_check_branch
      %146 = sbr.rel (%p143) target = $region32
    $region31: #{depthwise_conv2d.1} parent=5 // pred_region
      %s147 = ssub.s32 %s10, 1
      %p148 = pneg %p43
      %p149 = pneg %p40
      %p150 = pneg %p64
      %p151 = pneg %p61
      %p152 = pneg %p85
      %p153 = pneg %p82
      %p154 = pneg %p113
      %p155 = pneg %p110
      %s156 = smul.u32 8, %s20
      %p157 = scmp.lt.s32.totalorder %s19, 1
      %s158 = scalar_select %p157, %s19, 1
      %p159 = scmp.lt.s32.totalorder %s156, 15
      %s160 = scalar_select %p159, %s156, 15
      %s161 = smul.addr %s160, 2
      %s162 = smul.addr %s158, 32
      %s163 = sadd.s32 %s161, %s162
      %s164 = smul.addr %s163, 8
      %s165 = scalar_lea.vmem %s4, %s164
      %s166 = smul.u32 8, %s20
      %p167 = scmp.lt.s32.totalorder %s19, 1
      %s168 = scalar_select %p167, %s19, 1
      %p169 = scmp.lt.s32.totalorder %s166, 15
      %s170 = scalar_select %p169, %s166, 15
      %s171 = smul.addr %s170, 2
      %s172 = smul.addr %s168, 32
      %s173 = sadd.s32 %s171, %s172
      %s174 = smul.addr %s173, 8
      %s175 = scalar_lea.vmem %s4, %s174
      %s176 = smul.u32 8, %s20
      %s177 = smul.u32 %s20, 8
      $region33: #{depthwise_conv2d.1} parent=31
        #allocation3 [shape = 's32[1]{0}', space=sflag, size = 0x4, scoped, tag = 'scoped memory for depthwise_conv2d.1']
        %s178 = smul.u32 %s177, 24
        %s179 = smul.u32 %s19, 432
        %s180 = sadd.s32 %s178, %s179
        %s181 = scalar_lea.vmem %s0, %s180
        // Predicated region
        $region34: #{depthwise_conv2d.1} parent=33 // pred_check
          _
        $region35: #{depthwise_conv2d.1} parent=33 // pred_check_branch
          %183 = sbr.rel (0) target = $region37
        $region36: #{depthwise_conv2d.1} parent=33 // pred_region
          %s184 = scalar_lea.vmem %s181, 16
          %s185 = scalar_lea.vmem [#allocation2], 16
          loop: start=0, step=1, limit=1
          $region38: #{depthwise_conv2d.1} parent=36 // loop_pre_header
            _
          $region39: #{depthwise_conv2d.1} parent=36 // loop_header
            %s187 = sphi 0, %s191
            %p188 = scmp.ge.s32.totalorder %s187, 1
            %s192 = sphi %s181, %s181
            %s193 = sphi [#allocation2], [#allocation2]
          $region40: #{depthwise_conv2d.1} parent=36 // loop_header_branch
            %190 = sbr.rel (%p188) target = $region44
          $region41: #{depthwise_conv2d.1} parent=36 // loop_body
            %v194 = vld [vmem:[%s192] sm:$0xff]
            %195 = vst [vmem:[%s193] sm:$0xff] %v194
            %v196 = vld [vmem:[%s192 + $0x8] sm:$0xff]
            %197 = vst [vmem:[%s193 + $0x8] sm:$0xff] %v196
            %v198 = vld [vmem:[%s192 + $0x18] sm:$0xff]
            %199 = vst [vmem:[%s193 + $0x18] sm:$0xff] %v198
            %v200 = vld [vmem:[%s192 + $0x20] sm:$0xff]
            %201 = vst [vmem:[%s193 + $0x20] sm:$0xff] %v200
            %v202 = vld [vmem:[%s192 + $0x30] sm:$0xff]
            %203 = vst [vmem:[%s193 + $0x30] sm:$0xff] %v202
            %v204 = vld [vmem:[%s192 + $0x38] sm:$0xff]
            %205 = vst [vmem:[%s193 + $0x38] sm:$0xff] %v204
            %v206 = vld [vmem:[%s192 + $0x48] sm:$0xff]
            %207 = vst [vmem:[%s193 + $0x48] sm:$0xff] %v206
            %v208 = vld [vmem:[%s192 + $0x50] sm:$0xff]
            %209 = vst [vmem:[%s193 + $0x50] sm:$0xff] %v208
            %v210 = vld [vmem:[%s192 + $0x60] sm:$0xff]
            %211 = vst [vmem:[%s193 + $0x60] sm:$0xff] %v210
            %v212 = vld [vmem:[%s192 + $0x68] sm:$0xff]
            %213 = vst [vmem:[%s193 + $0x68] sm:$0xff] %v212
            %v214 = vld [vmem:[%s192 + $0x78] sm:$0xff]
            %215 = vst [vmem:[%s193 + $0x78] sm:$0xff] %v214
            %v216 = vld [vmem:[%s192 + $0x80] sm:$0xff]
            %217 = vst [vmem:[%s193 + $0x80] sm:$0xff] %v216
            %v218 = vld [vmem:[%s192 + $0x90] sm:$0xff]
            %219 = vst [vmem:[%s193 + $0x90] sm:$0xff] %v218
            %v220 = vld [vmem:[%s192 + $0x98] sm:$0xff]
            %221 = vst [vmem:[%s193 + $0x98] sm:$0xff] %v220
            %v222 = vld [vmem:[%s192 + $0xa8] sm:$0xff]
            %223 = vst [vmem:[%s193 + $0xa8] sm:$0xff] %v222
            %v224 = vld [vmem:[%s192 + $0xb0] sm:$0xff]
            %225 = vst [vmem:[%s193 + $0xb0] sm:$0xff] %v224
            %v226 = vld [vmem:[%s192 + $0xc0] sm:$0xff]
            %227 = vst [vmem:[%s193 + $0xc0] sm:$0xff] %v226
            %v228 = vld [vmem:[%s192 + $0xc8] sm:$0xff]
            %229 = vst [vmem:[%s193 + $0xc8] sm:$0xff] %v228
            %v230 = vld [vmem:[%s192 + $0xd8] sm:$0xff]
            %231 = vst [vmem:[%s193 + $0xd8] sm:$0xff] %v230
            %v232 = vld [vmem:[%s192 + $0xe0] sm:$0xff]
            %233 = vst [vmem:[%s193 + $0xe0] sm:$0xff] %v232
          $region42: #{depthwise_conv2d.1} parent=36 // loop_footer
            %s191 = sadd.s32 1, %s187
          $region43: #{depthwise_conv2d.1} parent=36 // loop_footer_branch
            %186 = sbr.rel target = $region39
          $region44: #{depthwise_conv2d.1} parent=36 // loop_exit
            _
          %s235 = ssub.s32 4, 1
          loop: start=0, step=1, limit=1
          $region45: #{depthwise_conv2d.1} parent=36 // loop_pre_header
            _
          $region46: #{depthwise_conv2d.1} parent=36 // loop_header
            %s237 = sphi 0, %s241
            %p238 = scmp.ge.s32.totalorder %s237, 1
            %s242 = sphi %s184, %s184
            %s243 = sphi %s185, %s185
          $region47: #{depthwise_conv2d.1} parent=36 // loop_header_branch
            %240 = sbr.rel (%p238) target = $region51
          $region48: #{depthwise_conv2d.1} parent=36 // loop_body
            %v244 = vld [vmem:[%s242] sm:%s235]
            %245 = vst [vmem:[%s243] sm:%s235] %v244
            %v246 = vld [vmem:[%s242 + $0x18] sm:%s235]
            %247 = vst [vmem:[%s243 + $0x18] sm:%s235] %v246
            %v248 = vld [vmem:[%s242 + $0x30] sm:%s235]
            %249 = vst [vmem:[%s243 + $0x30] sm:%s235] %v248
            %v250 = vld [vmem:[%s242 + $0x48] sm:%s235]
            %251 = vst [vmem:[%s243 + $0x48] sm:%s235] %v250
            %v252 = vld [vmem:[%s242 + $0x60] sm:%s235]
            %253 = vst [vmem:[%s243 + $0x60] sm:%s235] %v252
            %v254 = vld [vmem:[%s242 + $0x78] sm:%s235]
            %255 = vst [vmem:[%s243 + $0x78] sm:%s235] %v254
            %v256 = vld [vmem:[%s242 + $0x90] sm:%s235]
            %257 = vst [vmem:[%s243 + $0x90] sm:%s235] %v256
            %v258 = vld [vmem:[%s242 + $0xa8] sm:%s235]
            %259 = vst [vmem:[%s243 + $0xa8] sm:%s235] %v258
            %v260 = vld [vmem:[%s242 + $0xc0] sm:%s235]
            %261 = vst [vmem:[%s243 + $0xc0] sm:%s235] %v260
            %v262 = vld [vmem:[%s242 + $0xd8] sm:%s235]
            %263 = vst [vmem:[%s243 + $0xd8] sm:%s235] %v262
          $region49: #{depthwise_conv2d.1} parent=36 // loop_footer
            %s241 = sadd.s32 1, %s237
          $region50: #{depthwise_conv2d.1} parent=36 // loop_footer_branch
            %236 = sbr.rel target = $region46
          $region51: #{depthwise_conv2d.1} parent=36 // loop_exit
            _
        $region37: #{depthwise_conv2d.1} parent=33 // pred_fallthru
          _
        // Predicated region
        $region52: #{depthwise_conv2d.1} parent=33 // pred_check
          _
        $region53: #{depthwise_conv2d.1} parent=33 // pred_check_branch
          %266 = sbr.rel (0) target = $region55
        $region54: #{depthwise_conv2d.1} parent=33 // pred_region
          %267 = vsyncadd [#allocation3], 2880
        $region55: #{depthwise_conv2d.1} parent=33 // pred_fallthru
          _
        %s268 = smul.u32 10, 18
        %s269 = smul.u32 %s268, 1
        %s270 = sshll.u32 %s269, 4
        %271 = dma.done [#allocation3], %s270
      %v272 = vld [vmem:[%s1] sm:$0x7]
      %v273 = vld [vmem:[%s1 + $0x4] sm:$0x7]
      %v274 = vld [vmem:[%s1 + $0x8] sm:$0x7]
      %v275 = vld [vmem:[#allocation2] sm:$0xff]
      %v276 = vld [vmem:[#allocation2 + $0x8] sm:$0xff]
      %v277 = vld [vmem:[#allocation2 + $0x18] sm:$0xff]
      %v278 = vld [vmem:[#allocation2 + $0x20] sm:$0xff]
      %v279 = vld [vmem:[#allocation2 + $0x30] sm:$0xff]
      %v280 = vld [vmem:[#allocation2 + $0x38] sm:$0xff]
      %v281 = vld [vmem:[#allocation2 + $0x48] sm:$0xff]
      %v282 = vld [vmem:[#allocation2 + $0x50] sm:$0xff]
      %v283 = vld [vmem:[#allocation2 + $0x60] sm:$0xff]
      %v284 = vld [vmem:[#allocation2 + $0x68] sm:$0xff]
      %v285 = vld [vmem:[#allocation2 + $0x78] sm:$0xff]
      %v286 = vld [vmem:[#allocation2 + $0x80] sm:$0xff]
      %v287 = vld [vmem:[#allocation2 + $0x90] sm:$0xff]
      %v288 = vld [vmem:[#allocation2 + $0x98] sm:$0xff]
      %v289 = vld [vmem:[#allocation2 + $0xa8] sm:$0xff]
      %v290 = vld [vmem:[#allocation2 + $0xb0] sm:$0xff]
      %v291 = vperm.slane %v272, 0
      %v292 = vmul.f32 %v275, %v291
      %v293 = vmul.f32 %v276, %v291
      %v294 = vmul.f32 %v277, %v291
      %v295 = vmul.f32 %v278, %v291
      %v296 = vmul.f32 %v279, %v291
      %v297 = vmul.f32 %v280, %v291
      %v298 = vmul.f32 %v281, %v291
      %v299 = vmul.f32 %v282, %v291
      %v300 = vmul.f32 %v283, %v291
      %v301 = vmul.f32 %v284, %v291
      %v302 = vmul.f32 %v285, %v291
      %v303 = vmul.f32 %v286, %v291
      %v304 = vmul.f32 %v287, %v291
      %v305 = vmul.f32 %v288, %v291
      %v306 = vmul.f32 %v289, %v291
      %v307 = vmul.f32 %v290, %v291
      %v308 = vadd.f32 %v292, 0.0
      %v309 = vadd.f32 %v293, 0.0
      %v310 = vadd.f32 %v294, 0.0
      %v311 = vadd.f32 %v295, 0.0
      %v312 = vadd.f32 %v296, 0.0
      %v313 = vadd.f32 %v297, 0.0
      %v314 = vadd.f32 %v298, 0.0
      %v315 = vadd.f32 %v299, 0.0
      %v316 = vadd.f32 %v300, 0.0
      %v317 = vadd.f32 %v301, 0.0
      %v318 = vadd.f32 %v302, 0.0
      %v319 = vadd.f32 %v303, 0.0
      %v320 = vadd.f32 %v304, 0.0
      %v321 = vadd.f32 %v305, 0.0
      %v322 = vadd.f32 %v306, 0.0
      %v323 = vadd.f32 %v307, 0.0
      %v324 = vld [vmem:[#allocation2 + $0x1] sm:$0xff]
      %v325 = vld [vmem:[#allocation2 + $0x9] sm:$0xff]
      %v326 = vld [vmem:[#allocation2 + $0x19] sm:$0xff]
      %v327 = vld [vmem:[#allocation2 + $0x21] sm:$0xff]
      %v328 = vld [vmem:[#allocation2 + $0x31] sm:$0xff]
      %v329 = vld [vmem:[#allocation2 + $0x39] sm:$0xff]
      %v330 = vld [vmem:[#allocation2 + $0x49] sm:$0xff]
      %v331 = vld [vmem:[#allocation2 + $0x51] sm:$0xff]
      %v332 = vld [vmem:[#allocation2 + $0x61] sm:$0xff]
      %v333 = vld [vmem:[#allocation2 + $0x69] sm:$0xff]
      %v334 = vld [vmem:[#allocation2 + $0x79] sm:$0xff]
      %v335 = vld [vmem:[#allocation2 + $0x81] sm:$0xff]
      %v336 = vld [vmem:[#allocation2 + $0x91] sm:$0xff]
      %v337 = vld [vmem:[#allocation2 + $0x99] sm:$0xff]
      %v338 = vld [vmem:[#allocation2 + $0xa9] sm:$0xff]
      %v339 = vld [vmem:[#allocation2 + $0xb1] sm:$0xff]
      %v340 = vperm.slane %v272, 1
      %v341 = vmul.f32 %v324, %v340
      %v342 = vmul.f32 %v325, %v340
      %v343 = vmul.f32 %v326, %v340
      %v344 = vmul.f32 %v327, %v340
      %v345 = vmul.f32 %v328, %v340
      %v346 = vmul.f32 %v329, %v340
      %v347 = vmul.f32 %v330, %v340
      %v348 = vmul.f32 %v331, %v340
      %v349 = vmul.f32 %v332, %v340
      %v350 = vmul.f32 %v333, %v340
      %v351 = vmul.f32 %v334, %v340
      %v352 = vmul.f32 %v335, %v340
      %v353 = vmul.f32 %v336, %v340
      %v354 = vmul.f32 %v337, %v340
      %v355 = vmul.f32 %v338, %v340
      %v356 = vmul.f32 %v339, %v340
      %v357 = vadd.f32 %v308, %v341
      %v358 = vadd.f32 %v309, %v342
      %v359 = vadd.f32 %v310, %v343
      %v360 = vadd.f32 %v311, %v344
      %v361 = vadd.f32 %v312, %v345
      %v362 = vadd.f32 %v313, %v346
      %v363 = vadd.f32 %v314, %v347
      %v364 = vadd.f32 %v315, %v348
      %v365 = vadd.f32 %v316, %v349
      %v366 = vadd.f32 %v317, %v350
      %v367 = vadd.f32 %v318, %v351
      %v368 = vadd.f32 %v319, %v352
      %v369 = vadd.f32 %v320, %v353
      %v370 = vadd.f32 %v321, %v354
      %v371 = vadd.f32 %v322, %v355
      %v372 = vadd.f32 %v323, %v356
      %v373 = vld [vmem:[#allocation2 + $0x2] sm:$0xff]
      %v374 = vld [vmem:[#allocation2 + $0xa] sm:$0xff]
      %v375 = vld [vmem:[#allocation2 + $0x1a] sm:$0xff]
      %v376 = vld [vmem:[#allocation2 + $0x22] sm:$0xff]
      %v377 = vld [vmem:[#allocation2 + $0x32] sm:$0xff]
      %v378 = vld [vmem:[#allocation2 + $0x3a] sm:$0xff]
      %v379 = vld [vmem:[#allocation2 + $0x4a] sm:$0xff]
      %v380 = vld [vmem:[#allocation2 + $0x52] sm:$0xff]
      %v381 = vld [vmem:[#allocation2 + $0x62] sm:$0xff]
      %v382 = vld [vmem:[#allocation2 + $0x6a] sm:$0xff]
      %v383 = vld [vmem:[#allocation2 + $0x7a] sm:$0xff]
      %v384 = vld [vmem:[#allocation2 + $0x82] sm:$0xff]
      %v385 = vld [vmem:[#allocation2 + $0x92] sm:$0xff]
      %v386 = vld [vmem:[#allocation2 + $0x9a] sm:$0xff]
      %v387 = vld [vmem:[#allocation2 + $0xaa] sm:$0xff]
      %v388 = vld [vmem:[#allocation2 + $0xb2] sm:$0xff]
      %v389 = vperm.slane %v272, 2
      %v390 = vmul.f32 %v373, %v389
      %v391 = vmul.f32 %v374, %v389
      %v392 = vmul.f32 %v375, %v389
      %v393 = vmul.f32 %v376, %v389
      %v394 = vmul.f32 %v377, %v389
      %v395 = vmul.f32 %v378, %v389
      %v396 = vmul.f32 %v379, %v389
      %v397 = vmul.f32 %v380, %v389
      %v398 = vmul.f32 %v381, %v389
      %v399 = vmul.f32 %v382, %v389
      %v400 = vmul.f32 %v383, %v389
      %v401 = vmul.f32 %v384, %v389
      %v402 = vmul.f32 %v385, %v389
      %v403 = vmul.f32 %v386, %v389
      %v404 = vmul.f32 %v387, %v389
      %v405 = vmul.f32 %v388, %v389
      %v406 = vadd.f32 %v357, %v390
      %v407 = vadd.f32 %v358, %v391
      %v408 = vadd.f32 %v359, %v392
      %v409 = vadd.f32 %v360, %v393
      %v410 = vadd.f32 %v361, %v394
      %v411 = vadd.f32 %v362, %v395
      %v412 = vadd.f32 %v363, %v396
      %v413 = vadd.f32 %v364, %v397
      %v414 = vadd.f32 %v365, %v398
      %v415 = vadd.f32 %v366, %v399
      %v416 = vadd.f32 %v367, %v400
      %v417 = vadd.f32 %v368, %v401
      %v418 = vadd.f32 %v369, %v402
      %v419 = vadd.f32 %v370, %v403
      %v420 = vadd.f32 %v371, %v404
      %v421 = vadd.f32 %v372, %v405
      %s422 = scalar_lea.vmem [#allocation2], 24
      %v423 = vld [vmem:[%s422] sm:$0xff]
      %v424 = vld [vmem:[%s422 + $0x8] sm:$0xff]
      %v425 = vld [vmem:[%s422 + $0x18] sm:$0xff]
      %v426 = vld [vmem:[%s422 + $0x20] sm:$0xff]
      %v427 = vld [vmem:[%s422 + $0x30] sm:$0xff]
      %v428 = vld [vmem:[%s422 + $0x38] sm:$0xff]
      %v429 = vld [vmem:[%s422 + $0x48] sm:$0xff]
      %v430 = vld [vmem:[%s422 + $0x50] sm:$0xff]
      %v431 = vld [vmem:[%s422 + $0x60] sm:$0xff]
      %v432 = vld [vmem:[%s422 + $0x68] sm:$0xff]
      %v433 = vld [vmem:[%s422 + $0x78] sm:$0xff]
      %v434 = vld [vmem:[%s422 + $0x80] sm:$0xff]
      %v435 = vld [vmem:[%s422 + $0x90] sm:$0xff]
      %v436 = vld [vmem:[%s422 + $0x98] sm:$0xff]
      %v437 = vld [vmem:[%s422 + $0xa8] sm:$0xff]
      %v438 = vld [vmem:[%s422 + $0xb0] sm:$0xff]
      %v439 = vperm.slane %v273, 0
      %v440 = vmul.f32 %v423, %v439
      %v441 = vmul.f32 %v424, %v439
      %v442 = vmul.f32 %v425, %v439
      %v443 = vmul.f32 %v426, %v439
      %v444 = vmul.f32 %v427, %v439
      %v445 = vmul.f32 %v428, %v439
      %v446 = vmul.f32 %v429, %v439
      %v447 = vmul.f32 %v430, %v439
      %v448 = vmul.f32 %v431, %v439
      %v449 = vmul.f32 %v432, %v439
      %v450 = vmul.f32 %v433, %v439
      %v451 = vmul.f32 %v434, %v439
      %v452 = vmul.f32 %v435, %v439
      %v453 = vmul.f32 %v436, %v439
      %v454 = vmul.f32 %v437, %v439
      %v455 = vmul.f32 %v438, %v439
      %v456 = vadd.f32 %v406, %v440
      %v457 = vadd.f32 %v407, %v441
      %v458 = vadd.f32 %v408, %v442
      %v459 = vadd.f32 %v409, %v443
      %v460 = vadd.f32 %v410, %v444
      %v461 = vadd.f32 %v411, %v445
      %v462 = vadd.f32 %v412, %v446
      %v463 = vadd.f32 %v413, %v447
      %v464 = vadd.f32 %v414, %v448
      %v465 = vadd.f32 %v415, %v449
      %v466 = vadd.f32 %v416, %v450
      %v467 = vadd.f32 %v417, %v451
      %v468 = vadd.f32 %v418, %v452
      %v469 = vadd.f32 %v419, %v453
      %v470 = vadd.f32 %v420, %v454
      %v471 = vadd.f32 %v421, %v455
      %v472 = vld [vmem:[%s422 + $0x1] sm:$0xff]
      %v473 = vld [vmem:[%s422 + $0x9] sm:$0xff]
      %v474 = vld [vmem:[%s422 + $0x19] sm:$0xff]
      %v475 = vld [vmem:[%s422 + $0x21] sm:$0xff]
      %v476 = vld [vmem:[%s422 + $0x31] sm:$0xff]
      %v477 = vld [vmem:[%s422 + $0x39] sm:$0xff]
      %v478 = vld [vmem:[%s422 + $0x49] sm:$0xff]
      %v479 = vld [vmem:[%s422 + $0x51] sm:$0xff]
      %v480 = vld [vmem:[%s422 + $0x61] sm:$0xff]
      %v481 = vld [vmem:[%s422 + $0x69] sm:$0xff]
      %v482 = vld [vmem:[%s422 + $0x79] sm:$0xff]
      %v483 = vld [vmem:[%s422 + $0x81] sm:$0xff]
      %v484 = vld [vmem:[%s422 + $0x91] sm:$0xff]
      %v485 = vld [vmem:[%s422 + $0x99] sm:$0xff]
      %v486 = vld [vmem:[%s422 + $0xa9] sm:$0xff]
      %v487 = vld [vmem:[%s422 + $0xb1] sm:$0xff]
      %v488 = vperm.slane %v273, 1
      %v489 = vmul.f32 %v472, %v488
      %v490 = vmul.f32 %v473, %v488
      %v491 = vmul.f32 %v474, %v488
      %v492 = vmul.f32 %v475, %v488
      %v493 = vmul.f32 %v476, %v488
      %v494 = vmul.f32 %v477, %v488
      %v495 = vmul.f32 %v478, %v488
      %v496 = vmul.f32 %v479, %v488
      %v497 = vmul.f32 %v480, %v488
      %v498 = vmul.f32 %v481, %v488
      %v499 = vmul.f32 %v482, %v488
      %v500 = vmul.f32 %v483, %v488
      %v501 = vmul.f32 %v484, %v488
      %v502 = vmul.f32 %v485, %v488
      %v503 = vmul.f32 %v486, %v488
      %v504 = vmul.f32 %v487, %v488
      %v505 = vadd.f32 %v456, %v489
      %v506 = vadd.f32 %v457, %v490
      %v507 = vadd.f32 %v458, %v491
      %v508 = vadd.f32 %v459, %v492
      %v509 = vadd.f32 %v460, %v493
      %v510 = vadd.f32 %v461, %v494
      %v511 = vadd.f32 %v462, %v495
      %v512 = vadd.f32 %v463, %v496
      %v513 = vadd.f32 %v464, %v497
      %v514 = vadd.f32 %v465, %v498
      %v515 = vadd.f32 %v466, %v499
      %v516 = vadd.f32 %v467, %v500
      %v517 = vadd.f32 %v468, %v501
      %v518 = vadd.f32 %v469, %v502
      %v519 = vadd.f32 %v470, %v503
      %v520 = vadd.f32 %v471, %v504
      %v521 = vld [vmem:[%s422 + $0x2] sm:$0xff]
      %v522 = vld [vmem:[%s422 + $0xa] sm:$0xff]
      %v523 = vld [vmem:[%s422 + $0x1a] sm:$0xff]
      %v524 = vld [vmem:[%s422 + $0x22] sm:$0xff]
      %v525 = vld [vmem:[%s422 + $0x32] sm:$0xff]
      %v526 = vld [vmem:[%s422 + $0x3a] sm:$0xff]
      %v527 = vld [vmem:[%s422 + $0x4a] sm:$0xff]
      %v528 = vld [vmem:[%s422 + $0x52] sm:$0xff]
      %v529 = vld [vmem:[%s422 + $0x62] sm:$0xff]
      %v530 = vld [vmem:[%s422 + $0x6a] sm:$0xff]
      %v531 = vld [vmem:[%s422 + $0x7a] sm:$0xff]
      %v532 = vld [vmem:[%s422 + $0x82] sm:$0xff]
      %v533 = vld [vmem:[%s422 + $0x92] sm:$0xff]
      %v534 = vld [vmem:[%s422 + $0x9a] sm:$0xff]
      %v535 = vld [vmem:[%s422 + $0xaa] sm:$0xff]
      %v536 = vld [vmem:[%s422 + $0xb2] sm:$0xff]
      %v537 = vperm.slane %v273, 2
      %v538 = vmul.f32 %v521, %v537
      %v539 = vmul.f32 %v522, %v537
      %v540 = vmul.f32 %v523, %v537
      %v541 = vmul.f32 %v524, %v537
      %v542 = vmul.f32 %v525, %v537
      %v543 = vmul.f32 %v526, %v537
      %v544 = vmul.f32 %v527, %v537
      %v545 = vmul.f32 %v528, %v537
      %v546 = vmul.f32 %v529, %v537
      %v547 = vmul.f32 %v530, %v537
      %v548 = vmul.f32 %v531, %v537
      %v549 = vmul.f32 %v532, %v537
      %v550 = vmul.f32 %v533, %v537
      %v551 = vmul.f32 %v534, %v537
      %v552 = vmul.f32 %v535, %v537
      %v553 = vmul.f32 %v536, %v537
      %v554 = vadd.f32 %v505, %v538
      %v555 = vadd.f32 %v506, %v539
      %v556 = vadd.f32 %v507, %v540
      %v557 = vadd.f32 %v508, %v541
      %v558 = vadd.f32 %v509, %v542
      %v559 = vadd.f32 %v510, %v543
      %v560 = vadd.f32 %v511, %v544
      %v561 = vadd.f32 %v512, %v545
      %v562 = vadd.f32 %v513, %v546
      %v563 = vadd.f32 %v514, %v547
      %v564 = vadd.f32 %v515, %v548
      %v565 = vadd.f32 %v516, %v549
      %v566 = vadd.f32 %v517, %v550
      %v567 = vadd.f32 %v518, %v551
      %v568 = vadd.f32 %v519, %v552
      %v569 = vadd.f32 %v520, %v553
      %s570 = scalar_lea.vmem [#allocation2], 48
      %v571 = vld [vmem:[%s570] sm:$0xff]
      %v572 = vld [vmem:[%s570 + $0x8] sm:$0xff]
      %v573 = vld [vmem:[%s570 + $0x18] sm:$0xff]
      %v574 = vld [vmem:[%s570 + $0x20] sm:$0xff]
      %v575 = vld [vmem:[%s570 + $0x30] sm:$0xff]
      %v576 = vld [vmem:[%s570 + $0x38] sm:$0xff]
      %v577 = vld [vmem:[%s570 + $0x48] sm:$0xff]
      %v578 = vld [vmem:[%s570 + $0x50] sm:$0xff]
      %v579 = vld [vmem:[%s570 + $0x60] sm:$0xff]
      %v580 = vld [vmem:[%s570 + $0x68] sm:$0xff]
      %v581 = vld [vmem:[%s570 + $0x78] sm:$0xff]
      %v582 = vld [vmem:[%s570 + $0x80] sm:$0xff]
      %v583 = vld [vmem:[%s570 + $0x90] sm:$0xff]
      %v584 = vld [vmem:[%s570 + $0x98] sm:$0xff]
      %v585 = vld [vmem:[%s570 + $0xa8] sm:$0xff]
      %v586 = vld [vmem:[%s570 + $0xb0] sm:$0xff]
      %v587 = vperm.slane %v274, 0
      %v588 = vmul.f32 %v571, %v587
      %v589 = vmul.f32 %v572, %v587
      %v590 = vmul.f32 %v573, %v587
      %v591 = vmul.f32 %v574, %v587
      %v592 = vmul.f32 %v575, %v587
      %v593 = vmul.f32 %v576, %v587
      %v594 = vmul.f32 %v577, %v587
      %v595 = vmul.f32 %v578, %v587
      %v596 = vmul.f32 %v579, %v587
      %v597 = vmul.f32 %v580, %v587
      %v598 = vmul.f32 %v581, %v587
      %v599 = vmul.f32 %v582, %v587
      %v600 = vmul.f32 %v583, %v587
      %v601 = vmul.f32 %v584, %v587
      %v602 = vmul.f32 %v585, %v587
      %v603 = vmul.f32 %v586, %v587
      %v604 = vadd.f32 %v554, %v588
      %v605 = vadd.f32 %v555, %v589
      %v606 = vadd.f32 %v556, %v590
      %v607 = vadd.f32 %v557, %v591
      %v608 = vadd.f32 %v558, %v592
      %v609 = vadd.f32 %v559, %v593
      %v610 = vadd.f32 %v560, %v594
      %v611 = vadd.f32 %v561, %v595
      %v612 = vadd.f32 %v562, %v596
      %v613 = vadd.f32 %v563, %v597
      %v614 = vadd.f32 %v564, %v598
      %v615 = vadd.f32 %v565, %v599
      %v616 = vadd.f32 %v566, %v600
      %v617 = vadd.f32 %v567, %v601
      %v618 = vadd.f32 %v568, %v602
      %v619 = vadd.f32 %v569, %v603
      %v620 = vld [vmem:[%s570 + $0x1] sm:$0xff]
      %v621 = vld [vmem:[%s570 + $0x9] sm:$0xff]
      %v622 = vld [vmem:[%s570 + $0x19] sm:$0xff]
      %v623 = vld [vmem:[%s570 + $0x21] sm:$0xff]
      %v624 = vld [vmem:[%s570 + $0x31] sm:$0xff]
      %v625 = vld [vmem:[%s570 + $0x39] sm:$0xff]
      %v626 = vld [vmem:[%s570 + $0x49] sm:$0xff]
      %v627 = vld [vmem:[%s570 + $0x51] sm:$0xff]
      %v628 = vld [vmem:[%s570 + $0x61] sm:$0xff]
      %v629 = vld [vmem:[%s570 + $0x69] sm:$0xff]
      %v630 = vld [vmem:[%s570 + $0x79] sm:$0xff]
      %v631 = vld [vmem:[%s570 + $0x81] sm:$0xff]
      %v632 = vld [vmem:[%s570 + $0x91] sm:$0xff]
      %v633 = vld [vmem:[%s570 + $0x99] sm:$0xff]
      %v634 = vld [vmem:[%s570 + $0xa9] sm:$0xff]
      %v635 = vld [vmem:[%s570 + $0xb1] sm:$0xff]
      %v636 = vperm.slane %v274, 1
      %v637 = vmul.f32 %v620, %v636
      %v638 = vmul.f32 %v621, %v636
      %v639 = vmul.f32 %v622, %v636
      %v640 = vmul.f32 %v623, %v636
      %v641 = vmul.f32 %v624, %v636
      %v642 = vmul.f32 %v625, %v636
      %v643 = vmul.f32 %v626, %v636
      %v644 = vmul.f32 %v627, %v636
      %v645 = vmul.f32 %v628, %v636
      %v646 = vmul.f32 %v629, %v636
      %v647 = vmul.f32 %v630, %v636
      %v648 = vmul.f32 %v631, %v636
      %v649 = vmul.f32 %v632, %v636
      %v650 = vmul.f32 %v633, %v636
      %v651 = vmul.f32 %v634, %v636
      %v652 = vmul.f32 %v635, %v636
      %v653 = vadd.f32 %v604, %v637
      %v654 = vadd.f32 %v605, %v638
      %v655 = vadd.f32 %v606, %v639
      %v656 = vadd.f32 %v607, %v640
      %v657 = vadd.f32 %v608, %v641
      %v658 = vadd.f32 %v609, %v642
      %v659 = vadd.f32 %v610, %v643
      %v660 = vadd.f32 %v611, %v644
      %v661 = vadd.f32 %v612, %v645
      %v662 = vadd.f32 %v613, %v646
      %v663 = vadd.f32 %v614, %v647
      %v664 = vadd.f32 %v615, %v648
      %v665 = vadd.f32 %v616, %v649
      %v666 = vadd.f32 %v617, %v650
      %v667 = vadd.f32 %v618, %v651
      %v668 = vadd.f32 %v619, %v652
      %v669 = vld [vmem:[%s570 + $0x2] sm:$0xff]
      %v670 = vld [vmem:[%s570 + $0xa] sm:$0xff]
      %v671 = vld [vmem:[%s570 + $0x1a] sm:$0xff]
      %v672 = vld [vmem:[%s570 + $0x22] sm:$0xff]
      %v673 = vld [vmem:[%s570 + $0x32] sm:$0xff]
      %v674 = vld [vmem:[%s570 + $0x3a] sm:$0xff]
      %v675 = vld [vmem:[%s570 + $0x4a] sm:$0xff]
      %v676 = vld [vmem:[%s570 + $0x52] sm:$0xff]
      %v677 = vld [vmem:[%s570 + $0x62] sm:$0xff]
      %v678 = vld [vmem:[%s570 + $0x6a] sm:$0xff]
      %v679 = vld [vmem:[%s570 + $0x7a] sm:$0xff]
      %v680 = vld [vmem:[%s570 + $0x82] sm:$0xff]
      %v681 = vld [vmem:[%s570 + $0x92] sm:$0xff]
      %v682 = vld [vmem:[%s570 + $0x9a] sm:$0xff]
      %v683 = vld [vmem:[%s570 + $0xaa] sm:$0xff]
      %v684 = vld [vmem:[%s570 + $0xb2] sm:$0xff]
      %v685 = vperm.slane %v274, 2
      %v686 = vmul.f32 %v669, %v685
      %v687 = vmul.f32 %v670, %v685
      %v688 = vmul.f32 %v671, %v685
      %v689 = vmul.f32 %v672, %v685
      %v690 = vmul.f32 %v673, %v685
      %v691 = vmul.f32 %v674, %v685
      %v692 = vmul.f32 %v675, %v685
      %v693 = vmul.f32 %v676, %v685
      %v694 = vmul.f32 %v677, %v685
      %v695 = vmul.f32 %v678, %v685
      %v696 = vmul.f32 %v679, %v685
      %v697 = vmul.f32 %v680, %v685
      %v698 = vmul.f32 %v681, %v685
      %v699 = vmul.f32 %v682, %v685
      %v700 = vmul.f32 %v683, %v685
      %v701 = vmul.f32 %v684, %v685
      %v702 = vadd.f32 %v653, %v686
      %v703 = vadd.f32 %v654, %v687
      %v704 = vadd.f32 %v655, %v688
      %v705 = vadd.f32 %v656, %v689
      %v706 = vadd.f32 %v657, %v690
      %v707 = vadd.f32 %v658, %v691
      %v708 = vadd.f32 %v659, %v692
      %v709 = vadd.f32 %v660, %v693
      %v710 = vadd.f32 %v661, %v694
      %v711 = vadd.f32 %v662, %v695
      %v712 = vadd.f32 %v663, %v696
      %v713 = vadd.f32 %v664, %v697
      %v714 = vadd.f32 %v665, %v698
      %v715 = vadd.f32 %v666, %v699
      %v716 = vadd.f32 %v667, %v700
      %v717 = vadd.f32 %v668, %v701
      %v718 = vld [vmem:[%s2] sm:$0xff]
      %v719 = vld [vmem:[%s2 + $0x8] sm:$0xff]
      %v720 = vld [vmem:[%s2 + $0x10] sm:$0xff]
      %v721 = vld [vmem:[%s2 + $0x18] sm:$0xff]
      %v722 = vld [vmem:[%s2 + $0x20] sm:$0xff]
      %v723 = vld [vmem:[%s2 + $0x28] sm:$0xff]
      %v724 = vld [vmem:[%s2 + $0x30] sm:$0xff]
      %v725 = vld [vmem:[%s2 + $0x38] sm:$0xff]
      %v726 = vld [vmem:[%s2 + $0x40] sm:$0xff]
      %v727 = vld [vmem:[%s2 + $0x48] sm:$0xff]
      %v728 = vld [vmem:[%s2 + $0x50] sm:$0xff]
      %v729 = vld [vmem:[%s2 + $0x58] sm:$0xff]
      %v730 = vld [vmem:[%s2 + $0x60] sm:$0xff]
      %v731 = vld [vmem:[%s2 + $0x68] sm:$0xff]
      %v732 = vld [vmem:[%s2 + $0x70] sm:$0xff]
      %v733 = vld [vmem:[%s2 + $0x78] sm:$0xff]
      %v734 = vld [vmem:[%s3] sm:$0x1]
      %v736 = vperm.slane %v734, 0
      %738 = vmatpush.msra.mxu0 %v733
      %739 = vmatpush.msra.mxu0 %v732
      %740 = vmatpush.msra.mxu0 %v731
      %741 = vmatpush.msra.mxu0 %v730
      %742 = vmatpush.msra.mxu0 %v729
      %743 = vmatpush.msra.mxu0 %v728
      %744 = vmatpush.msra.mxu0 %v727
      %745 = vmatpush.msra.mxu0 %v726
      %746 = vmatpush.msra.mxu0 %v725
      %747 = vmatpush.msra.mxu0 %v724
      %748 = vmatpush.msra.mxu0 %v723
      %749 = vmatpush.msra.mxu0 %v722
      %750 = vmatpush.msra.mxu0 %v721
      %751 = vmatpush.msra.mxu0 %v720
      %752 = vmatpush.msra.mxu0 %v719
      %753 = vmatpush.msra.mxu0 %v718
      %754 = vmatmul.f32.gmra.mxu0 %v702
      %v755 = vpop.f32.mrf.mxu0
      %v756 = vadd.f32 %v736, %v755
      %757 = vmatmul.f32.gmra.mxu0 %v703
      %v758 = vpop.f32.mrf.mxu0
      %v759 = vadd.f32 %v736, %v758
      %760 = vmatmul.f32.gmra.mxu0 %v704
      %v761 = vpop.f32.mrf.mxu0
      %v762 = vadd.f32 %v736, %v761
      %763 = vmatmul.f32.gmra.mxu0 %v705
      %v764 = vpop.f32.mrf.mxu0
      %v765 = vadd.f32 %v736, %v764
      %766 = vmatmul.f32.gmra.mxu0 %v706
      %v767 = vpop.f32.mrf.mxu0
      %v768 = vadd.f32 %v736, %v767
      %769 = vmatmul.f32.gmra.mxu0 %v707
      %v770 = vpop.f32.mrf.mxu0
      %v771 = vadd.f32 %v736, %v770
      %772 = vmatmul.f32.gmra.mxu0 %v708
      %v773 = vpop.f32.mrf.mxu0
      %v774 = vadd.f32 %v736, %v773
      %775 = vmatmul.f32.gmra.mxu0 %v709
      %v776 = vpop.f32.mrf.mxu0
      %v777 = vadd.f32 %v736, %v776
      %778 = vmatmul.f32.gmra.mxu0 %v710
      %v779 = vpop.f32.mrf.mxu0
      %v780 = vadd.f32 %v736, %v779
      %781 = vmatmul.f32.gmra.mxu0 %v711
      %v782 = vpop.f32.mrf.mxu0
      %v783 = vadd.f32 %v736, %v782
      %784 = vmatmul.f32.gmra.mxu0 %v712
      %v785 = vpop.f32.mrf.mxu0
      %v786 = vadd.f32 %v736, %v785
      %787 = vmatmul.f32.gmra.mxu0 %v713
      %v788 = vpop.f32.mrf.mxu0
      %v789 = vadd.f32 %v736, %v788
      %790 = vmatmul.f32.gmra.mxu0 %v714
      %v791 = vpop.f32.mrf.mxu0
      %v792 = vadd.f32 %v736, %v791
      %793 = vmatmul.f32.gmra.mxu0 %v715
      %v794 = vpop.f32.mrf.mxu0
      %v795 = vadd.f32 %v736, %v794
      %796 = vmatmul.f32.gmra.mxu0 %v716
      %v797 = vpop.f32.mrf.mxu0
      %v798 = vadd.f32 %v736, %v797
      %799 = vmatmul.f32.gmra.mxu0 %v717
      %v800 = vpop.f32.mrf.mxu0
      %v801 = vadd.f32 %v736, %v800
      %802 = vdwg.mxu0
      %803 = vst [vmem:[%s175] sm:$0xff] %v756
      %804 = vst [vmem:[%s175 + $0x8] sm:$0xff] %v759
      %805 = vst [vmem:[%s175 + $0x10] sm:$0xff] %v762
      %806 = vst [vmem:[%s175 + $0x18] sm:$0xff] %v765
      %807 = vst [vmem:[%s175 + $0x20] sm:$0xff] %v768
      %808 = vst [vmem:[%s175 + $0x28] sm:$0xff] %v771
      %809 = vst [vmem:[%s175 + $0x30] sm:$0xff] %v774
      %810 = vst [vmem:[%s175 + $0x38] sm:$0xff] %v777
      %811 = vst [vmem:[%s175 + $0x40] sm:$0xff] %v780
      %812 = vst [vmem:[%s175 + $0x48] sm:$0xff] %v783
      %813 = vst [vmem:[%s175 + $0x50] sm:$0xff] %v786
      %814 = vst [vmem:[%s175 + $0x58] sm:$0xff] %v789
      %815 = vst [vmem:[%s175 + $0x60] sm:$0xff] %v792
      %816 = vst [vmem:[%s175 + $0x68] sm:$0xff] %v795
      %817 = vst [vmem:[%s175 + $0x70] sm:$0xff] %v798
      %818 = vst [vmem:[%s175 + $0x78] sm:$0xff] %v801
      %s819 = smul.u32 8, %s20
      %p820 = scmp.lt.s32.totalorder %s19, 1
      %s821 = scalar_select %p820, %s19, 1
      %p822 = scmp.lt.s32.totalorder %s819, 15
      %s823 = scalar_select %p822, %s819, 15
      %s824 = smul.addr %s823, 2
      %s825 = smul.addr %s821, 32
      %s826 = sadd.s32 %s824, %s825
      %s827 = smul.addr %s826, 8
      %s828 = scalar_lea.vmem %s4, %s827
      // Predicated region
      $region56: #{depthwise_conv2d.1} parent=31 // pred_check
        %p829 = pneg %p110
      $region57: #{depthwise_conv2d.1} parent=31 // pred_check_branch
        %831 = sbr.rel (%p829) target = $region59
      $region58: #{depthwise_conv2d.1} parent=31 // pred_region
        %s832 = smul.u32 8, %s20
      $region59: #{depthwise_conv2d.1} parent=31 // pred_fallthru
        _
    $region32: #{depthwise_conv2d.1} parent=5 // pred_fallthru
      _
    %p833 = scmp.le.s32.totalorder 2, %s10
    // Predicated region
    $region60: #{depthwise_conv2d.1} parent=5 // pred_check
      %p834 = pneg %p833
    $region61: #{depthwise_conv2d.1} parent=5 // pred_check_branch
      %836 = sbr.rel (%p834) target = $region63
    $region62: #{depthwise_conv2d.1} parent=5 // pred_region
      %s837 = ssub.s32 %s10, 2
      // Predicated region
      $region64: #{depthwise_conv2d.1} parent=62 // pred_check
        %p838 = pneg %p116
      $region65: #{depthwise_conv2d.1} parent=62 // pred_check_branch
        %840 = sbr.rel (%p838) target = $region67
      $region66: #{depthwise_conv2d.1} parent=62 // pred_region
        %s841 = smul.u32 8, %s22
        %p842 = scmp.lt.s32.totalorder %s21, 1
        %s843 = scalar_select %p842, %s21, 1
        %p844 = scmp.lt.s32.totalorder %s841, 15
        %s845 = scalar_select %p844, %s841, 15
        %s846 = smul.addr %s845, 2
        %s847 = smul.addr %s843, 32
        %s848 = sadd.s32 %s846, %s847
        %s849 = smul.addr %s848, 8
        %s850 = scalar_lea.vmem %s4, %s849
      $region67: #{depthwise_conv2d.1} parent=62 // pred_fallthru
        _
    $region63: #{depthwise_conv2d.1} parent=5 // pred_fallthru
      _
  $region6: #{depthwise_conv2d.1} parent=0 // loop_footer
    %s14 = sadd.s32 1, %s10
  $region7: #{depthwise_conv2d.1} parent=0 // loop_footer_branch
    %9 = sbr.rel target = $region3
  $region8: #{depthwise_conv2d.1} parent=0 // loop_exit
    _

</llo_original>
